<compile_context>
chip_gen: v6e
topology: v6e:2x2x1
jax: 0.10.0
libtpu: 0.0.40
codegen_flags: <defaults>
</compile_context>

<pallas_src>
import functools
import math

import jax
import jax.numpy as jnp
from jax.experimental import pallas as pl
from jax.experimental.pallas import tpu as pltpu


# ---------------------------------------------------------------------------
# Hardware / sizing helpers
# ---------------------------------------------------------------------------

@functools.lru_cache(maxsize=None)
def _vmem_capacity_bytes():
    """Per-TensorCore VMEM capacity; conservative v7x fallback if unknown."""
    try:
        cap = int(pltpu.get_tpu_info().vmem_capacity_bytes)
        if cap > 0:
            return cap
    except Exception:
        pass
    return 64 * 1024 * 1024


def _sublane_granule(dtype):
    """Packed sublane granularity: 8 (f32), 16 (bf16), 32 (int8/fp8)."""
    return max(8, 32 // jnp.dtype(dtype).itemsize)


def _round_up(x, m):
    return ((x + m - 1) // m) * m


def _tile_and_pad(dim, granule, target):
    """Pick (tile, padded_dim): tile divides padded_dim, is a multiple of
    `granule` (or the full extent for dims <= granule) and stays <= target.
    Awkward dims are padded once in HBM (cheap, mem-bound) instead of using
    masked / misaligned full-extent tiles."""
    if dim <= granule:
        return dim, dim                       # full-extent block, always legal
    padded = _round_up(dim, granule)
    if padded <= target:
        return padded, padded
    best = 0
    # Prefer 256-aligned tiles (v6e/v7x MXU is 256x256), then granule-aligned.
    for g in {max(granule, 256), granule}:
        if g > target:
            continue
        t = (target // g) * g
        while t >= g:
            if padded % t == 0:
                best = max(best, t)
                break
            t -= g
    if best:
        return best, padded
    # No clean divisor: pad further to a multiple of the target-sized tile so
    # the per-step VMEM footprint stays bounded (v7x safety).
    tile = (target // granule) * granule
    return tile, _round_up(padded, tile)


def _pick_group_block(g, per_group_bytes, budget_bytes, other_parallel_steps,
                      min_parallel_steps=4):
    """Largest divisor of g fitting the VMEM budget, but capped so the grid
    keeps >= min_parallel_steps parallel iterations (megacore sharding on v7x
    and DMA/compute pipelining on all generations)."""
    gb = max(1, min(g, budget_bytes // max(per_group_bytes, 1)))
    while g % gb != 0:
        gb -= 1
    while gb > 1 and (g // gb) * other_parallel_steps < min_parallel_steps:
        gb -= 1
        while gb > 1 and g % gb != 0:
            gb -= 1
    return gb


# ---------------------------------------------------------------------------
# Kernels
# ---------------------------------------------------------------------------

def _bmm_kernel_single_k(a_ref, b_ref, o_ref, *, eq):
    """Whole contraction fits in one K tile: no accumulator, direct store."""
    o_ref[...] = jnp.einsum(
        eq, a_ref[...], b_ref[...],
        preferred_element_type=jnp.float32).astype(o_ref.dtype)


def _bmm_kernel_multi_k(a_ref, b_ref, o_ref, acc_ref, *, eq):
    """Tiled contraction: f32 VMEM accumulator over the (last) K grid axis."""
    k = pl.program_id(3)

    @pl.when(k == 0)
    def _init():
        acc_ref[...] = jnp.zeros_like(acc_ref)

    acc_ref[...] += jnp.einsum(
        eq, a_ref[...], b_ref[...], preferred_element_type=jnp.float32)

    @pl.when(k == pl.num_programs(3) - 1)
    def _done():
        o_ref[...] = acc_ref[...].astype(o_ref.dtype)


# ---------------------------------------------------------------------------
# Batched matmul driver
# ---------------------------------------------------------------------------

def _batched_matmul(a3, b3, a_is_km, b_is_nk, out_dtype):
    """a3: (G,M,K) or (G,K,M) if a_is_km; b3: (G,K,N) or (G,N,K) if b_is_nk.
    Returns (G, M, N)."""
    G = a3.shape[0]
    if a_is_km:
        K, M = a3.shape[1], a3.shape[2]
    else:
        M, K = a3.shape[1], a3.shape[2]
    N = b3.shape[1] if b_is_nk else b3.shape[2]

    isa = a3.dtype.itemsize
    isb = b3.dtype.itemsize
    iso = jnp.dtype(out_dtype).itemsize

    sub_a = _sublane_granule(a3.dtype)
    sub_b = _sublane_granule(b3.dtype)
    sub_o = _sublane_granule(out_dtype)

    # Layout-dependent alignment granules (lane axes need 128; sublane axes
    # need the dtype's packed sublane size).
    gm = 128 if a_is_km else max(sub_a, sub_o)
    gn = 128
    gk = max(sub_a, sub_b) if (a_is_km and not b_is_nk) else 128

    cap = _vmem_capacity_bytes()
    budget = (2 * cap) // 5               # resident-block budget per grid step
    big = budget >= (40 << 20)            # v5e/v6e (128 MiB) vs v7x (64 MiB)
    tgt_m = 1024 if big else 512
    tgt_n = 1024 if big else 512
    tgt_k = 2048 if big else 1024

    tm, Mp = _tile_and_pad(M, gm, tgt_m)
    tn, Np = _tile_and_pad(N, gn, tgt_n)
    tk, Kp = _tile_and_pad(K, gk, tgt_k)

    def _pad3(x, d1, d2):
        p1, p2 = d1 - x.shape[1], d2 - x.shape[2]
        if p1 == 0 and p2 == 0:
            return x
        return jnp.pad(x, ((0, 0), (0, p1), (0, p2)))

    a3 = _pad3(a3, Kp, Mp) if a_is_km else _pad3(a3, Mp, Kp)
    b3 = _pad3(b3, Np, Kp) if b_is_nk else _pad3(b3, Kp, Np)

    k_steps = Kp // tk
    single_k = (k_steps == 1)

    # Deeper input buffering on long contraction loops where VMEM is plentiful
    # (v5e is the most DMA-exposed generation and has 128 MiB to spare).
    bufs = 3 if (not single_k and k_steps >= 4 and cap >= (96 << 20)) else 2

    per_group = (bufs * (tm * tk * isa + tk * tn * isb)
                 + 2 * tm * tn * iso
                 + (0 if single_k else tm * tn * 4))

    other_parallel = (Mp // tm) * (Np // tn)
    gb = _pick_group_block(G, per_group, budget, other_parallel)

    total_block_bytes = gb * per_group
    vmem_limit = int(min(cap - (8 << 20),
                         max(32 << 20, total_block_bytes + (12 << 20))))

    eq = (("gkm" if a_is_km else "gmk") + ","
          + ("gnk" if b_is_nk else "gkn") + "->gmn")

    a_block = (gb, tk, tm) if a_is_km else (gb, tm, tk)
    b_block = (gb, tn, tk) if b_is_nk else (gb, tk, tn)
    o_block = (gb, tm, tn)

    in_kwargs = dict(pipeline_mode=pl.Buffered(bufs)) if bufs != 2 else {}

    cost = pl.CostEstimate(
        flops=2 * G * Mp * Np * Kp,
        transcendentals=0,
        bytes_accessed=(G * Mp * Kp * isa * (Np // tn)     # A re-read per N tile
                        + G * Kp * Np * isb * (Mp // tm)   # B re-read per M tile
                        + G * Mp * Np * iso),
    )

    if single_k:
        a_map = (lambda g, i, j: (g, 0, i)) if a_is_km else (lambda g, i, j: (g, i, 0))
        b_map = (lambda g, i, j: (g, j, 0)) if b_is_nk else (lambda g, i, j: (g, 0, j))
        o_map = lambda g, i, j: (g, i, j)
        grid = (G // gb, Mp // tm, Np // tn)
        kernel = functools.partial(_bmm_kernel_single_k, eq=eq)
        scratch = []
        semantics = ("parallel", "parallel", "parallel")
    else:
        a_map = (lambda g, i, j, k: (g, k, i)) if a_is_km else (lambda g, i, j, k: (g, i, k))
        b_map = (lambda g, i, j, k: (g, j, k)) if b_is_nk else (lambda g, i, j, k: (g, k, j))
        o_map = lambda g, i, j, k: (g, i, j)
        grid = (G // gb, Mp // tm, Np // tn, k_steps)
        kernel = functools.partial(_bmm_kernel_multi_k, eq=eq)
        scratch = [pltpu.VMEM((gb, tm, tn), jnp.float32)]
        semantics = ("parallel", "parallel", "parallel", "arbitrary")

    out_p = pl.pallas_call(
        kernel,
        out_shape=jax.ShapeDtypeStruct((G, Mp, Np), out_dtype),
        grid_spec=pltpu.PrefetchScalarGridSpec(
            num_scalar_prefetch=0,
            grid=grid,
            in_specs=[pl.BlockSpec(a_block, a_map, **in_kwargs),
                      pl.BlockSpec(b_block, b_map, **in_kwargs)],
            out_specs=pl.BlockSpec(o_block, o_map),
            scratch_shapes=scratch,
        ),
        compiler_params=pltpu.CompilerParams(
            dimension_semantics=semantics,
            vmem_limit_bytes=vmem_limit,
        ),
        cost_estimate=cost,
    )(a3, b3)

    if Mp != M or Np != N:
        out_p = out_p[:, :M, :N]
    return out_p


# ---------------------------------------------------------------------------
# Equation parsing / wrapper
# ---------------------------------------------------------------------------

def _is_identity(perm):
    return list(perm) == list(range(len(perm)))


def _plan(equation, a_shape, b_shape):
    eq = equation.replace(" ", "")
    if "->" not in eq:
        # TODO(synk): implicit-output einsum equations are not supported.
        raise NotImplementedError("einsum_pallas requires an explicit '->'.")
    lhs, out = eq.split("->")
    specs = lhs.split(",")
    if len(specs) != 2:
        # TODO(synk): only two-operand contractions are implemented in Pallas.
        raise NotImplementedError("einsum_pallas supports two operands only.")
    sa, sb = specs
    if (len(set(sa)) != len(sa) or len(set(sb)) != len(sb)
            or len(set(out)) != len(out)):
        # TODO(synk): repeated (diagonal) indices are not supported.
        raise NotImplementedError("repeated indices are not supported.")
    if len(sa) != len(a_shape) or len(sb) != len(b_shape):
        raise ValueError("equation rank does not match operand rank.")

    sizes = {}
    for labels, shape in ((sa, a_shape), (sb, b_shape)):
        for c, d in zip(labels, shape):
            if c in sizes and sizes[c] != d:
                raise ValueError(f"size mismatch for index '{c}'.")
            sizes[c] = d

    set_a, set_b, set_o = set(sa), set(sb), set(out)
    if not set_o <= (set_a | set_b):
        raise ValueError("output index missing from inputs.")

    batch = [c for c in sa if c in set_b and c in set_o]
    contract = [c for c in sa if c in set_b and c not in set_o]
    free_a = [c for c in sa if c not in set_b]
    free_b = [c for c in sb if c not in set_a]
    if any(c not in set_o for c in free_a + free_b):
        # TODO(synk): indices summed out of a single operand are unsupported.
        raise NotImplementedError("summed-out free indices are not supported.")

    return sa, sb, out, sizes, batch, contract, free_a, free_b


def _arrange(operand, labels, sizes, batch, x, y):
    """Reshape `operand` to 3D as (G, |x|, |y|) or (G, |y|, |x|), whichever of
    the two label orders is already the operand's natural layout (avoids an
    HBM transpose).  Returns (array3d, swapped_xy)."""
    prod = lambda ls: int(math.prod(sizes[c] for c in ls)) if ls else 1
    perm_xy = [labels.index(c) for c in batch + x + y]
    perm_yx = [labels.index(c) for c in batch + y + x]
    if _is_identity(perm_xy):
        perm, swapped = perm_xy, False
    elif _is_identity(perm_yx):
        perm, swapped = perm_yx, True
    else:
        perm, swapped = perm_xy, False
    t = operand if _is_identity(perm) else jnp.transpose(operand, perm)
    if swapped:
        return t.reshape(prod(batch), prod(y), prod(x)), True
    return t.reshape(prod(batch), prod(x), prod(y)), False


def einsum_pallas(equation, *operands, compute_dtype=None):
    """torch.einsum(equation, *operands) for two-operand contractions.

    compute_dtype: optional opt-in reduced-precision mode (e.g. jnp.bfloat16):
    operands are cast before the kernel, MXU accumulation stays f32, and the
    output keeps the operands' promoted dtype.
    """
    if len(operands) != 2:
        # TODO(synk): >2-operand einsum has no single-kernel Pallas mapping here.
        raise NotImplementedError("einsum_pallas supports exactly two operands.")
    a, b = operands
    sa, sb, out, sizes, batch, contract, free_a, free_b = _plan(
        equation, a.shape, b.shape)

    out_dtype = jnp.result_type(a, b)
    if compute_dtype is not None:
        a = a.astype(compute_dtype)
        b = b.astype(compute_dtype)

    prod = lambda ls: int(math.prod(sizes[c] for c in ls)) if ls else 1
    Ma, Nb = prod(free_a), prod(free_b)

    # Lane-dense output: if the natural output lane axis (free_b) is narrow
    # (< 128, e.g. head_dim=64) but free_a is wide, compute the transposed
    # product so every kernel store is an unmasked, lane-dense vst; only the
    # small result tensor is transposed back by XLA.
    swap = (Nb < 128) and (Ma >= 128)
    if swap:
        lhs_op, lhs_labels, rows = b, sb, free_b
        rhs_op, rhs_labels, cols = a, sa, free_a
    else:
        lhs_op, lhs_labels, rows = a, sa, free_a
        rhs_op, rhs_labels, cols = b, sb, free_b

    # LHS prefers (batch, rows, contract); (batch, contract, rows) accepted.
    a3, a_is_km = _arrange(lhs_op, lhs_labels, sizes, batch, rows, contract)
    # RHS prefers (batch, contract, cols); (batch, cols, contract) accepted.
    b3, b_is_nk = _arrange(rhs_op, rhs_labels, sizes, batch, contract, cols)

    out3 = _batched_matmul(a3, b3, a_is_km, b_is_nk, out_dtype)  # (G, |rows|, |cols|)

    inter = batch + rows + cols
    res = out3.reshape(tuple(sizes[c] for c in inter))
    perm_out = [inter.index(c) for c in out]
    if not _is_identity(perm_out):
        res = jnp.transpose(res, perm_out)
    return res


if __name__ == "__main__":
    key = jax.random.PRNGKey(0)
    k1, k2, k3, k4, k5 = jax.random.split(key, 5)

    # Small ViT-attention-like shapes: batch=2, heads=4, seq=16, head_dim=32.
    B, H, S, D = 2, 4, 16, 32
    scale = 0.25
    q = scale * jax.random.normal(k1, (B, H, S, D), dtype=jnp.float32)
    kk = scale * jax.random.normal(k2, (B, H, S, D), dtype=jnp.float32)
    v = scale * jax.random.normal(k3, (B, H, S, D), dtype=jnp.float32)

    # einsum('bhid,bhjd->bhij'): q @ k^T attention logits.
    logits = jax.block_until_ready(einsum_pallas("bhid,bhjd->bhij", q, kk))
    ref_logits = jnp.einsum("bhid,bhjd->bhij", q, kk)
    assert logits.shape == ref_logits.shape and logits.dtype == ref_logits.dtype
    assert jnp.allclose(logits, ref_logits, atol=2e-2, rtol=2e-2)

    # einsum('bhij,bhjd->bhid'): attn @ v context.
    attn = jax.nn.softmax(ref_logits, axis=-1)
    ctx = jax.block_until_ready(einsum_pallas("bhij,bhjd->bhid", attn, v))
    ref_ctx = jnp.einsum("bhij,bhjd->bhid", attn, v)
    assert ctx.shape == ref_ctx.shape and ctx.dtype == ref_ctx.dtype
    assert jnp.allclose(ctx, ref_ctx, atol=2e-2, rtol=2e-2)

    # Lane-dense (swapped-operand) path: wide seq with a narrow head_dim output.
    B2, H2, S2, D2 = 1, 2, 128, 32
    attn2 = jax.nn.softmax(
        scale * jax.random.normal(k4, (B2, H2, S2, S2), dtype=jnp.float32), axis=-1)
    v2 = scale * jax.random.normal(k5, (B2, H2, S2, D2), dtype=jnp.float32)
    ctx2 = jax.block_until_ready(einsum_pallas("bhij,bhjd->bhid", attn2, v2))
    ref_ctx2 = jnp.einsum("bhij,bhjd->bhid", attn2, v2)
    assert ctx2.shape == ref_ctx2.shape and ctx2.dtype == ref_ctx2.dtype
    assert jnp.allclose(ctx2, ref_ctx2, atol=2e-2, rtol=2e-2)

    print("KERNEL_OK")
</pallas_src>

<mosaic_0001>
module attributes {stable_mosaic.version = 11 : i64} {
  func.func @_bmm_kernel_single_k(%arg0: i32, %arg1: i32, %arg2: i32, %arg3: memref<2x16x32xf32, #tpu.memory_space<vmem>>, %arg4: memref<2x16x32xf32, #tpu.memory_space<vmem>>, %arg5: memref<2x16x16xf32, #tpu.memory_space<vmem>>) attributes {dimension_semantics = [#tpu.dimension_semantics<parallel>, #tpu.dimension_semantics<parallel>, #tpu.dimension_semantics<parallel>], iteration_bounds = array<i64: 4, 1, 1>, scalar_prefetch = 0 : i64, scratch_operands = 0 : i64, tpu.core_type = #tpu.core_type<tc>, window_params = [{transform_indices = @transform_0, window_bounds = array<i64: 2, 16, 32>}, {transform_indices = @transform_1, window_bounds = array<i64: 2, 16, 32>}, {transform_indices = @transform_2, window_bounds = array<i64: 2, 16, 16>}]} {
    %c0 = arith.constant 0 : index
    %c0_0 = arith.constant 0 : index
    %c0_1 = arith.constant 0 : index
    %0 = vector.load %arg3[%c0, %c0_0, %c0_1] : memref<2x16x32xf32, #tpu.memory_space<vmem>>, vector<2x16x32xf32>
    %c0_2 = arith.constant 0 : index
    %c0_3 = arith.constant 0 : index
    %c0_4 = arith.constant 0 : index
    %1 = vector.load %arg4[%c0_2, %c0_3, %c0_4] : memref<2x16x32xf32, #tpu.memory_space<vmem>>, vector<2x16x32xf32>
    "tpu.trace_start"() <{level = 10 : i32, message = "gmk,gnk->gmn"}> : () -> ()
    %cst = arith.constant dense<0.000000e+00> : vector<2x16x16xf32>
    %2 = tpu.matmul %0, %1, %cst {dimension_numbers = #tpu.dot_dimension_numbers<[2], [2], [1], [1], [0, 0, 0, 1, 1, 1], [0], [0]>} : vector<2x16x32xf32>, vector<2x16x32xf32>, vector<2x16x16xf32> -> vector<2x16x16xf32>
    "tpu.trace_stop"() : () -> ()
    %c0_5 = arith.constant 0 : index
    %c0_6 = arith.constant 0 : index
    %c0_7 = arith.constant 0 : index
    %3 = vector.load %arg5[%c0_5, %c0_6, %c0_7] : memref<2x16x16xf32, #tpu.memory_space<vmem>>, vector<2x16x16xf32>
    tpu.vector_store %arg5[%c0_5, %c0_6, %c0_7], %2 {strides = array<i32>} : memref<2x16x16xf32, #tpu.memory_space<vmem>>, vector<2x16x16xf32>,
    return
  }
  func.func @transform_0(%arg0: i32, %arg1: i32, %arg2: i32) -> (i32, i32, i32) {
    %c0_i32 = arith.constant 0 : i32
    %c0_i32_0 = arith.constant 0 : i32
    return %arg0, %arg1, %c0_i32 : i32, i32, i32
  }
  func.func @transform_1(%arg0: i32, %arg1: i32, %arg2: i32) -> (i32, i32, i32) {
    %c0_i32 = arith.constant 0 : i32
    %c0_i32_0 = arith.constant 0 : i32
    return %arg0, %arg2, %c0_i32 : i32, i32, i32
  }
  func.func @transform_2(%arg0: i32, %arg1: i32, %arg2: i32) -> (i32, i32, i32) {
    %c0_i32 = arith.constant 0 : i32
    return %arg0, %arg1, %arg2 : i32, i32, i32
  }
}

</mosaic_0001>

<llo_original>
// kernel: tpu_custom_call.1
$region0: #{tpu_custom_call.1}
  #allocation0 [shape = 'u32[]', space=smem, size = 0x4, offset = 0x4, fixed_abs, tag = 'smem constant byte address 0x4 - core index']
  #allocation1 [shape = 'u32[144,128]{1,0:T(1,128)}', space=vmem, size = 0x12000, scoped, tag = 'internal scratch']
  %s0 = inlined_call_operand.hbm [shape: f32[8,16,32], index: 0, kind: input, shape index: {}]
  %s1 = inlined_call_operand.hbm [shape: f32[8,16,32], index: 1, kind: input, shape index: {}]
  %s2 = inlined_call_operand.hbm [shape: f32[8,16,16], index: 2, kind: output, shape index: {}]
  %s3 = sld [smem:[#allocation0]]
  $region49: #{tpu_custom_call.1} parent=0
    _
  %s5 = ssub.s32 1, %s3
  %s6 = scalar_select 0, %s5, %s3
  $region1: #{tpu_custom_call.1} parent=0
    #allocation2 [shape = 'u8[32768]{0}', space=vmem, size = 0x8000, scoped, tag = 'input window, operand 0']
    #allocation3 [shape = 's32[2]{0}', space=sflag, size = 0x8, scoped, tag = 'scoped memory for tpu_custom_call.1']
    #allocation4 [shape = 's32[2]{0}', space=sflag, size = 0x8, scoped, tag = 'scoped memory for tpu_custom_call.1']
    #allocation5 [shape = 'u8[32768]{0}', space=vmem, size = 0x8000, scoped, tag = 'input window, operand 1']
    #allocation6 [shape = 's32[2]{0}', space=sflag, size = 0x8, scoped, tag = 'scoped memory for tpu_custom_call.1']
    #allocation7 [shape = 'u8[32768]{0}', space=vmem, size = 0x8000, scoped, tag = 'output window, operand 0']
    %7 = vsyncpa [#allocation3], 0
    %s8 = scalar_lea.sflag [#allocation3], 1
    %9 = vsyncpa %s8, 0
    %10 = vsyncpa [#allocation6], 0
    %s11 = scalar_lea.sflag [#allocation6], 1
    %12 = vsyncpa %s11, 0
    %13 = vsyncpa [#allocation4], 0
    %s14 = scalar_lea.sflag [#allocation4], 1
    %15 = vsyncpa %s14, 0
    loop: start=0, step=1, limit=6
    $region2: #{tpu_custom_call.1} parent=1 // loop_pre_header
      _
    $region3: #{tpu_custom_call.1} parent=1 // loop_header
      %s17 = sphi 0, %s21
      %p18 = scmp.ge.s32.totalorder %s17, 6
      %s24 = sphi 0, %s43
      %s25 = sphi 0, %s39
      %s26 = sphi 0, %s35
      %s27 = sphi 0, %s24
      %s28 = sphi 0, %s25
      %s29 = sphi 0, %s26
      %s30 = sphi 0, %s27
      %s31 = sphi 0, %s28
      %s32 = sphi 0, %s29
      %s48 = sphi 0, %s50
      %s51 = sphi 0, %s48
      %s52 = sphi 0, %s51
      %s68 = sphi 0, %s52
      %s76 = sphi 0, %s78
      %s79 = sphi 0, %s76
      %s80 = sphi 0, %s79
      %s96 = sphi 0, %s80
      %s106 = sphi 0, %s108
      %s109 = sphi 0, %s106
      %s110 = sphi 0, %s109
      %s126 = sphi 0, %s110
    $region4: #{tpu_custom_call.1} parent=1 // loop_header_branch
      %20 = sbr.rel (%p18) target = $region8
    $region5: #{tpu_custom_call.1} parent=1 // loop_body
      %s22 = ssub.s32 %s17, 1
      %s23 = ssub.s32 %s17, 2
      %s33 = sadd.s32 1, %s26
      %p34 = scmp.ge.s32.totalorder %s33, 1
      %s35 = scalar_select %p34, 0, %s33
      %s36 = sadd.s32 1, %s25
      %s37 = scalar_select %p34, %s36, %s25
      %p38 = scmp.ge.s32.totalorder %s37, 1
      %s39 = scalar_select %p38, 0, %s37
      %s40 = sadd.s32 1, %s24
      %s41 = scalar_select %p38, %s40, %s24
      %p42 = scmp.ge.s32.totalorder %s41, 4
      %s43 = scalar_select %p42, 0, %s41
      %s44 = ssub.s32 %s24, %s43
      %s45 = ssub.s32 %s25, %s39
      %s46 = sor.u32 %s44, %s45
      %p47 = scmp.eq.s32.totalorder %s46, 0
      %s49 = sadd.s32 %s48, 1
      %s50 = scalar_select %p47, %s48, %s49
      %p53 = pneg %p47
      %p54 = scmp.eq.s32.totalorder %s17, 3
      %p55 = por %p53, %p54
      %p56 = scmp.ne.s32.totalorder %s48, %s51
      %p57 = scmp.eq.s32.totalorder %s17, 0
      %p58 = por %p56, %p57
      %p59 = scmp.ne.s32.totalorder %s48, %s51
      %p60 = scmp.eq.s32.totalorder %s22, 3
      %p61 = por %p59, %p60
      %p62 = scmp.ne.s32.totalorder %s51, %s52
      %p63 = scmp.eq.s32.totalorder %s22, 0
      %p64 = por %p62, %p63
      %p65 = scmp.ne.s32.totalorder %s51, %s52
      %p66 = scmp.eq.s32.totalorder %s23, 3
      %p67 = por %p65, %p66
      %p69 = scmp.ne.s32.totalorder %s52, %s68
      %p70 = scmp.eq.s32.totalorder %s23, 0
      %p71 = por %p69, %p70
      %s72 = ssub.s32 %s24, %s43
      %s73 = ssub.s32 %s26, %s35
      %s74 = sor.u32 %s72, %s73
      %p75 = scmp.eq.s32.totalorder %s74, 0
      %s77 = sadd.s32 %s76, 1
      %s78 = scalar_select %p75, %s76, %s77
      %p81 = pneg %p75
      %p82 = scmp.eq.s32.totalorder %s17, 3
      %p83 = por %p81, %p82
      %p84 = scmp.ne.s32.totalorder %s76, %s79
      %p85 = scmp.eq.s32.totalorder %s17, 0
      %p86 = por %p84, %p85
      %p87 = scmp.ne.s32.totalorder %s76, %s79
      %p88 = scmp.eq.s32.totalorder %s22, 3
      %p89 = por %p87, %p88
      %p90 = scmp.ne.s32.totalorder %s79, %s80
      %p91 = scmp.eq.s32.totalorder %s22, 0
      %p92 = por %p90, %p91
      %p93 = scmp.ne.s32.totalorder %s79, %s80
      %p94 = scmp.eq.s32.totalorder %s23, 3
      %p95 = por %p93, %p94
      %p97 = scmp.ne.s32.totalorder %s80, %s96
      %p98 = scmp.eq.s32.totalorder %s23, 0
      %p99 = por %p97, %p98
      %s100 = ssub.s32 %s24, %s43
      %s101 = ssub.s32 %s25, %s39
      %s102 = sor.u32 %s100, %s101
      %s103 = ssub.s32 %s26, %s35
      %s104 = sor.u32 %s102, %s103
      %p105 = scmp.eq.s32.totalorder %s104, 0
      %s107 = sadd.s32 %s106, 1
      %s108 = scalar_select %p105, %s106, %s107
      %p111 = pneg %p105
      %p112 = scmp.eq.s32.totalorder %s17, 3
      %p113 = por %p111, %p112
      %p114 = scmp.ne.s32.totalorder %s106, %s109
      %p115 = scmp.eq.s32.totalorder %s17, 0
      %p116 = por %p114, %p115
      %p117 = scmp.ne.s32.totalorder %s106, %s109
      %p118 = scmp.eq.s32.totalorder %s22, 3
      %p119 = por %p117, %p118
      %p120 = scmp.ne.s32.totalorder %s109, %s110
      %p121 = scmp.eq.s32.totalorder %s22, 0
      %p122 = por %p120, %p121
      %p123 = scmp.ne.s32.totalorder %s109, %s110
      %p124 = scmp.eq.s32.totalorder %s23, 3
      %p125 = por %p123, %p124
      %p127 = scmp.ne.s32.totalorder %s110, %s126
      %p128 = scmp.eq.s32.totalorder %s23, 0
      %p129 = por %p127, %p128
      %p130 = scmp.le.s32.totalorder 1, %s17
      %p131 = scmp.lt.s32.totalorder %s17, 5
      %p132 = pnand %p130, %p131
      %p133 = pneg %p132
      // Predicated region
      $region9: #{tpu_custom_call.1} parent=5 // pred_check
        _
      $region10: #{tpu_custom_call.1} parent=5 // pred_check_branch
        %135 = sbr.rel (%p132) target = $region12
      $region11: #{tpu_custom_call.1} parent=5 // pred_region
        %s136 = ssub.s32 %s17, 1
      $region12: #{tpu_custom_call.1} parent=5 // pred_fallthru
        _
      %p137 = scmp.lt.s32.totalorder %s17, 4
      // Predicated region
      $region13: #{tpu_custom_call.1} parent=5 // pred_check
        %p138 = pneg %p137
      $region14: #{tpu_custom_call.1} parent=5 // pred_check_branch
        %140 = sbr.rel (%p138) target = $region16
      $region15: #{tpu_custom_call.1} parent=5 // pred_region
        // Predicated region
        $region17: #{tpu_custom_call.1} parent=15 // pred_check
          %p141 = pneg %p58
        $region18: #{tpu_custom_call.1} parent=15 // pred_check_branch
          %143 = sbr.rel (%p141) target = $region20
        $region19: #{tpu_custom_call.1} parent=15 // pred_region
          %s144 = sand.u32 %s48, 1
          %s145 = scalar_lea.sflag [#allocation3], %s144
          %s146 = sand.u32 %s48, 1
          %s147 = smul.addr %s146, 32
          %s148 = scalar_lea.vmem [#allocation2], %s147
          %s149 = smul.u32 2, %s24
          %s150 = smul.u32 2, %s25
          %s152 = ssub.s32 512, 512
          %153 = vsyncadd %s145, %s152
          %s154 = smul.addr %s149, 2
          %s155 = sadd.s32 %s150, %s154
          %s156 = smul.addr %s155, 128
          %s157 = scalar_lea.hbm %s0, %s156
          %s158 = sshll.u32 %s148, 4
          %s159 = int_to_ptr.vmem [resolvable:$true] %s158
          %164 = dma.hbm_to_vmem [thread:$0]  %s157, 512, %s159, %s145, 128, 128, 8
        $region20: #{tpu_custom_call.1} parent=15 // pred_fallthru
          _
        // Predicated region
        $region21: #{tpu_custom_call.1} parent=15 // pred_check
          %p165 = pneg %p86
        $region22: #{tpu_custom_call.1} parent=15 // pred_check_branch
          %167 = sbr.rel (%p165) target = $region24
        $region23: #{tpu_custom_call.1} parent=15 // pred_region
          %s168 = sand.u32 %s76, 1
          %s169 = scalar_lea.sflag [#allocation6], %s168
          %s170 = sand.u32 %s76, 1
          %s171 = smul.addr %s170, 32
          %s172 = scalar_lea.vmem [#allocation5], %s171
          %s173 = smul.u32 2, %s24
          %s174 = smul.u32 2, %s26
          %s176 = ssub.s32 512, 512
          %177 = vsyncadd %s169, %s176
          %s178 = smul.addr %s173, 2
          %s179 = sadd.s32 %s174, %s178
          %s180 = smul.addr %s179, 128
          %s181 = scalar_lea.hbm %s1, %s180
          %s182 = sshll.u32 %s172, 4
          %s183 = int_to_ptr.vmem [resolvable:$true] %s182
          %188 = dma.hbm_to_vmem [thread:$0]  %s181, 512, %s183, %s169, 128, 128, 8
        $region24: #{tpu_custom_call.1} parent=15 // pred_fallthru
          _
      $region16: #{tpu_custom_call.1} parent=5 // pred_fallthru
        _
      %p189 = scmp.le.s32.totalorder 1, %s17
      %p190 = scmp.lt.s32.totalorder %s17, 5
      %p191 = pnand %p189, %p190
      %p192 = pneg %p191
      // Predicated region
      $region25: #{tpu_custom_call.1} parent=5 // pred_check
        _
      $region26: #{tpu_custom_call.1} parent=5 // pred_check_branch
        %194 = sbr.rel (%p191) target = $region28
      $region27: #{tpu_custom_call.1} parent=5 // pred_region
        %s195 = ssub.s32 %s17, 1
        %s196 = sand.u32 %s51, 1
        %s197 = scalar_lea.sflag [#allocation3], %s196
        %s198 = sand.u32 %s51, 1
        %s199 = smul.addr %s198, 32
        %s200 = scalar_lea.vmem [#allocation2], %s199
        // Predicated region
        $region29: #{tpu_custom_call.1} parent=27 // pred_check
          %p201 = pneg %p64
        $region30: #{tpu_custom_call.1} parent=27 // pred_check_branch
          %203 = sbr.rel (%p201) target = $region32
        $region31: #{tpu_custom_call.1} parent=27 // pred_region
          %204 = dma.done %s197, 512
        $region32: #{tpu_custom_call.1} parent=27 // pred_fallthru
          _
        %s205 = sand.u32 %s79, 1
        %s206 = scalar_lea.sflag [#allocation6], %s205
        %s207 = sand.u32 %s79, 1
        %s208 = smul.addr %s207, 32
        %s209 = scalar_lea.vmem [#allocation5], %s208
        // Predicated region
        $region33: #{tpu_custom_call.1} parent=27 // pred_check
          %p210 = pneg %p92
        $region34: #{tpu_custom_call.1} parent=27 // pred_check_branch
          %212 = sbr.rel (%p210) target = $region36
        $region35: #{tpu_custom_call.1} parent=27 // pred_region
          %213 = dma.done %s206, 512
        $region36: #{tpu_custom_call.1} parent=27 // pred_fallthru
          _
        %s214 = sand.u32 %s51, 1
        %s215 = scalar_lea.sflag [#allocation3], %s214
        %s216 = sand.u32 %s51, 1
        %s217 = smul.addr %s216, 32
        %s218 = scalar_lea.vmem [#allocation2], %s217
        %p219 = pneg %p64
        %p220 = pneg %p61
        %s221 = sand.u32 %s79, 1
        %s222 = scalar_lea.sflag [#allocation6], %s221
        %s223 = sand.u32 %s79, 1
        %s224 = smul.addr %s223, 32
        %s225 = scalar_lea.vmem [#allocation5], %s224
        %p226 = pneg %p92
        %p227 = pneg %p89
        %p228 = pneg %p122
        %p229 = pneg %p119
        %s230 = sand.u32 %s109, 1
        %s231 = scalar_lea.sflag [#allocation4], %s230
        %s232 = sand.u32 %s109, 1
        %s233 = smul.addr %s232, 32
        %s234 = scalar_lea.vmem [#allocation7], %s233
        %s235 = smul.u32 2, %s27
        %s236 = smul.u32 2, %s28
        %s237 = smul.u32 2, %s27
        %s238 = smul.u32 2, %s29
        %s239 = smul.u32 2, %s27
        %s240 = smul.u32 2, %s28
        %v241 = vld [vmem:[%s200] sm:$0xff]
        %v242 = vld [vmem:[%s200 + $0x8] sm:$0xff]
        %v243 = vld [vmem:[%s200 + $0x10] sm:$0xff]
        %v244 = vld [vmem:[%s200 + $0x18] sm:$0xff]
        %v245 = vld [vmem:[%s209] sm:$0xff]
        %v246 = vld [vmem:[%s209 + $0x8] sm:$0xff]
        %v247 = vld [vmem:[%s209 + $0x10] sm:$0xff]
        %v248 = vld [vmem:[%s209 + $0x18] sm:$0xff]
        %vm249 = vcmask 261120
        %v251 = vsel %vm249, %v241, 0
        %v254 = vsel %vm249, %v242, 0
        %v257 = vsel %vm249, %v245, 0
        %v260 = vsel %vm249, %v246, 0
        %262 = vmatprep.subr.mxu0 0.0
        %263 = vmatpush1.xpose.msra.mxu0 0.0
        %264 = vmatprep.subr.mxu0 0.0
        %265 = vmatpush1.xpose.msra.mxu0 0.0
        %266 = vmatprep.subr.mxu0 0.0
        %267 = vmatpush1.xpose.msra.mxu0 0.0
        %268 = vmatprep.subr.mxu0 0.0
        %269 = vmatpush1.xpose.msra.mxu0 0.0
        %270 = vmatprep.subr.mxu0 0.0
        %271 = vmatpush1.xpose.msra.mxu0 0.0
        %272 = vmatprep.subr.mxu0 0.0
        %273 = vmatpush1.xpose.msra.mxu0 0.0
        %274 = vmatprep.subr.mxu0 0.0
        %275 = vmatpush1.xpose.msra.mxu0 0.0
        %276 = vmatprep.subr.mxu0 0.0
        %277 = vmatpush1.xpose.msra.mxu0 0.0
        %278 = vmatprep.subr.mxu0 0.0
        %279 = vmatpush1.xpose.msra.mxu0 0.0
        %280 = vmatprep.subr.mxu0 0.0
        %281 = vmatpush1.xpose.msra.mxu0 0.0
        %282 = vmatprep.subr.mxu0 0.0
        %283 = vmatpush1.xpose.msra.mxu0 0.0
        %284 = vmatprep.subr.mxu0 0.0
        %285 = vmatpush1.xpose.msra.mxu0 0.0
        %286 = vmatprep.subr.mxu0 0.0
        %287 = vmatpush1.xpose.msra.mxu0 0.0
        %288 = vmatprep.subr.mxu0 0.0
        %289 = vmatpush1.xpose.msra.mxu0 0.0
        %290 = vmatprep.subr.mxu0 0.0
        %291 = vmatpush1.xpose.msra.mxu0 %v260
        %292 = vmatprep.subr.mxu0 0.0
        %293 = vmatpush1.xpose.msra.mxu0 %v257
        %294 = vmatprep.subr.mxu0 0.0
        %295 = vmatpush2.xpose.msra.mxu0 0.0
        %296 = vmatprep.subr.mxu0 0.0
        %297 = vmatpush2.xpose.msra.mxu0 0.0
        %298 = vmatprep.subr.mxu0 0.0
        %299 = vmatpush2.xpose.msra.mxu0 0.0
        %300 = vmatprep.subr.mxu0 0.0
        %301 = vmatpush2.xpose.msra.mxu0 0.0
        %302 = vmatprep.subr.mxu0 0.0
        %303 = vmatpush2.xpose.msra.mxu0 0.0
        %304 = vmatprep.subr.mxu0 0.0
        %305 = vmatpush2.xpose.msra.mxu0 0.0
        %306 = vmatprep.subr.mxu0 0.0
        %307 = vmatpush2.xpose.msra.mxu0 0.0
        %308 = vmatprep.subr.mxu0 0.0
        %309 = vmatpush2.xpose.msra.mxu0 0.0
        %310 = vmatprep.subr.mxu0 0.0
        %311 = vmatpush2.xpose.msra.mxu0 0.0
        %312 = vmatprep.subr.mxu0 0.0
        %313 = vmatpush2.xpose.msra.mxu0 0.0
        %314 = vmatprep.subr.mxu0 0.0
        %315 = vmatpush2.xpose.msra.mxu0 0.0
        %316 = vmatprep.subr.mxu0 0.0
        %317 = vmatpush2.xpose.msra.mxu0 0.0
        %318 = vmatprep.subr.mxu0 0.0
        %319 = vmatpush2.xpose.msra.mxu0 0.0
        %320 = vmatprep.subr.mxu0 0.0
        %321 = vmatpush2.xpose.msra.mxu0 0.0
        %322 = vmatprep.subr.mxu0 0.0
        %323 = vmatpush2.xpose.msra.mxu0 0.0
        %324 = vmatprep.subr.mxu0 0.0
        %325 = vmatpush2.xpose.msra.mxu0 0.0
        %326 = vmatprep.mubr.f32.mxu0 0.0
        %327 = vmatmul.mubr.f32.gmra.mxu0 %v251
        %v328 = vpop.f32.mrf.mxu0
        %v329 = vadd.f32 0.0, %v328
        %v330 = vpop.f32.mrf.mxu0
        %331 = vmatprep.mubr.f32.mxu0 0.0
        %332 = vmatmul.mubr.f32.gmra.mxu0 %v254
        %v333 = vpop.f32.mrf.mxu0
        %v334 = vadd.f32 0.0, %v333
        %v335 = vpop.f32.mrf.mxu0
        %336 = vdwg.mxu0
        %v338 = vsel %vm249, %v243, 0
        %v341 = vsel %vm249, %v244, 0
        %v344 = vsel %vm249, %v247, 0
        %v347 = vsel %vm249, %v248, 0
        %349 = vmatprep.subr.mxu0 0.0
        %350 = vmatpush1.xpose.msra.mxu0 0.0
        %351 = vmatprep.subr.mxu0 0.0
        %352 = vmatpush1.xpose.msra.mxu0 0.0
        %353 = vmatprep.subr.mxu0 0.0
        %354 = vmatpush1.xpose.msra.mxu0 0.0
        %355 = vmatprep.subr.mxu0 0.0
        %356 = vmatpush1.xpose.msra.mxu0 0.0
        %357 = vmatprep.subr.mxu0 0.0
        %358 = vmatpush1.xpose.msra.mxu0 0.0
        %359 = vmatprep.subr.mxu0 0.0
        %360 = vmatpush1.xpose.msra.mxu0 0.0
        %361 = vmatprep.subr.mxu0 0.0
        %362 = vmatpush1.xpose.msra.mxu0 0.0
        %363 = vmatprep.subr.mxu0 0.0
        %364 = vmatpush1.xpose.msra.mxu0 0.0
        %365 = vmatprep.subr.mxu0 0.0
        %366 = vmatpush1.xpose.msra.mxu0 0.0
        %367 = vmatprep.subr.mxu0 0.0
        %368 = vmatpush1.xpose.msra.mxu0 0.0
        %369 = vmatprep.subr.mxu0 0.0
        %370 = vmatpush1.xpose.msra.mxu0 0.0
        %371 = vmatprep.subr.mxu0 0.0
        %372 = vmatpush1.xpose.msra.mxu0 0.0
        %373 = vmatprep.subr.mxu0 0.0
        %374 = vmatpush1.xpose.msra.mxu0 0.0
        %375 = vmatprep.subr.mxu0 0.0
        %376 = vmatpush1.xpose.msra.mxu0 0.0
        %377 = vmatprep.subr.mxu0 0.0
        %378 = vmatpush1.xpose.msra.mxu0 %v347
        %379 = vmatprep.subr.mxu0 0.0
        %380 = vmatpush1.xpose.msra.mxu0 %v344
        %381 = vmatprep.subr.mxu0 0.0
        %382 = vmatpush2.xpose.msra.mxu0 0.0
        %383 = vmatprep.subr.mxu0 0.0
        %384 = vmatpush2.xpose.msra.mxu0 0.0
        %385 = vmatprep.subr.mxu0 0.0
        %386 = vmatpush2.xpose.msra.mxu0 0.0
        %387 = vmatprep.subr.mxu0 0.0
        %388 = vmatpush2.xpose.msra.mxu0 0.0
        %389 = vmatprep.subr.mxu0 0.0
        %390 = vmatpush2.xpose.msra.mxu0 0.0
        %391 = vmatprep.subr.mxu0 0.0
        %392 = vmatpush2.xpose.msra.mxu0 0.0
        %393 = vmatprep.subr.mxu0 0.0
        %394 = vmatpush2.xpose.msra.mxu0 0.0
        %395 = vmatprep.subr.mxu0 0.0
        %396 = vmatpush2.xpose.msra.mxu0 0.0
        %397 = vmatprep.subr.mxu0 0.0
        %398 = vmatpush2.xpose.msra.mxu0 0.0
        %399 = vmatprep.subr.mxu0 0.0
        %400 = vmatpush2.xpose.msra.mxu0 0.0
        %401 = vmatprep.subr.mxu0 0.0
        %402 = vmatpush2.xpose.msra.mxu0 0.0
        %403 = vmatprep.subr.mxu0 0.0
        %404 = vmatpush2.xpose.msra.mxu0 0.0
        %405 = vmatprep.subr.mxu0 0.0
        %406 = vmatpush2.xpose.msra.mxu0 0.0
        %407 = vmatprep.subr.mxu0 0.0
        %408 = vmatpush2.xpose.msra.mxu0 0.0
        %409 = vmatprep.subr.mxu0 0.0
        %410 = vmatpush2.xpose.msra.mxu0 0.0
        %411 = vmatprep.subr.mxu0 0.0
        %412 = vmatpush2.xpose.msra.mxu0 0.0
        %413 = vmatprep.mubr.f32.mxu0 0.0
        %414 = vmatmul.mubr.f32.gmra.mxu0 %v338
        %v415 = vpop.f32.mrf.mxu0
        %v416 = vadd.f32 0.0, %v415
        %v417 = vpop.f32.mrf.mxu0
        %418 = vmatprep.mubr.f32.mxu0 0.0
        %419 = vmatmul.mubr.f32.gmra.mxu0 %v341
        %v420 = vpop.f32.mrf.mxu0
        %v421 = vadd.f32 0.0, %v420
        %v422 = vpop.f32.mrf.mxu0
        %423 = vdwg.mxu0
        %vm424 = vcmask 130048
        %425 = vst.msk [vmem:[%s234] sm:$0xff] %vm424, %v329
        %426 = vst.msk [vmem:[%s234 + $0x8] sm:$0xff] %vm424, %v334
        %427 = vst.msk [vmem:[%s234 + $0x10] sm:$0xff] %vm424, %v416
        %428 = vst.msk [vmem:[%s234 + $0x18] sm:$0xff] %vm424, %v421
        %s429 = sand.u32 %s109, 1
        %s430 = scalar_lea.sflag [#allocation4], %s429
        %s431 = sand.u32 %s109, 1
        %s432 = smul.addr %s431, 32
        %s433 = scalar_lea.vmem [#allocation7], %s432
        // Predicated region
        $region37: #{tpu_custom_call.1} parent=27 // pred_check
          %p434 = pneg %p119
        $region38: #{tpu_custom_call.1} parent=27 // pred_check_branch
          %436 = sbr.rel (%p434) target = $region40
        $region39: #{tpu_custom_call.1} parent=27 // pred_region
          %s437 = smul.u32 2, %s27
          %s438 = smul.u32 2, %s28
          %s440 = ssub.s32 512, 512
          %441 = vsyncadd %s430, %s440
          %s442 = sadd.s32 %s29, %s438
          %s443 = smul.addr %s437, 2
          %s444 = sadd.s32 %s442, %s443
          %s445 = smul.addr %s444, 128
          %s446 = scalar_lea.hbm %s2, %s445
          %s447 = sshll.u32 %s433, 4
          %s448 = int_to_ptr.vmem [resolvable:$true] %s447
          %453 = dma.vmem_to_hbm [thread:$0]  %s448, 512, %s446, %s430, 128, 128, 8
        $region40: #{tpu_custom_call.1} parent=27 // pred_fallthru
          _
      $region28: #{tpu_custom_call.1} parent=5 // pred_fallthru
        _
      %p454 = scmp.le.s32.totalorder 2, %s17
      // Predicated region
      $region41: #{tpu_custom_call.1} parent=5 // pred_check
        %p455 = pneg %p454
      $region42: #{tpu_custom_call.1} parent=5 // pred_check_branch
        %457 = sbr.rel (%p455) target = $region44
      $region43: #{tpu_custom_call.1} parent=5 // pred_region
        %s458 = ssub.s32 %s17, 2
        // Predicated region
        $region45: #{tpu_custom_call.1} parent=43 // pred_check
          %p459 = pneg %p125
        $region46: #{tpu_custom_call.1} parent=43 // pred_check_branch
          %461 = sbr.rel (%p459) target = $region48
        $region47: #{tpu_custom_call.1} parent=43 // pred_region
          %s462 = sand.u32 %s110, 1
          %s463 = scalar_lea.sflag [#allocation4], %s462
          %s464 = sand.u32 %s110, 1
          %s465 = smul.addr %s464, 32
          %s466 = scalar_lea.vmem [#allocation7], %s465
          %467 = dma.done %s463, 512
        $region48: #{tpu_custom_call.1} parent=43 // pred_fallthru
          _
      $region44: #{tpu_custom_call.1} parent=5 // pred_fallthru
        _
    $region6: #{tpu_custom_call.1} parent=1 // loop_footer
      %s21 = sadd.s32 1, %s17
    $region7: #{tpu_custom_call.1} parent=1 // loop_footer_branch
      %16 = sbr.rel target = $region3
    $region8: #{tpu_custom_call.1} parent=1 // loop_exit
      _
    %468 = vsyncpa [#allocation3], 1
    %s469 = scalar_lea.sflag [#allocation3], 1
    %470 = vsyncpa %s469, 1
    %471 = vsyncpa [#allocation6], 1
    %s472 = scalar_lea.sflag [#allocation6], 1
    %473 = vsyncpa %s472, 1
    %474 = vsyncpa [#allocation4], 1
    %s475 = scalar_lea.sflag [#allocation4], 1
    %476 = vsyncpa %s475, 1

</llo_original>
